<compile_context>
chip_gen: v7x
topology: tpu7x:2x2x1
jax: 0.10.0
libtpu: 0.0.40
codegen_flags: <defaults>
</compile_context>

<pallas_src>
import functools

import jax
import jax.numpy as jnp
from jax.experimental import pallas as pl
from jax.experimental.pallas import tpu as pltpu


def _projector_kernel(x_ref, w_ref, b_ref, o_ref):
    # x_ref: (TM, H)  w_ref: (H, TN)  b_ref: (1, TN)  o_ref: (TM, TN)
    acc = jnp.dot(x_ref[...], w_ref[...], preferred_element_type=jnp.float32)
    acc = acc + b_ref[...].astype(jnp.float32)  # bias broadcast over rows, f32
    o_ref[...] = acc.astype(o_ref.dtype)


def _choose_row_tile(M, tile_m, min_tile=64):
    """Pick a row tile. Returns (tm, needs_padding)."""
    if M <= tile_m:
        return M, False                      # single full-extent block
    t = (tile_m // 8) * 8
    while t >= min_tile:
        if M % t == 0:
            return t, False                  # exact divisor -> no padding
        t -= 8
    return tile_m, True                      # ragged M -> fall back to padding


@functools.partial(jax.jit, static_argnames=("tile_m", "tile_n", "compute_dtype"))
def paligemma_multimodal_projector(image_features, weight_t, bias, *,
                                   tile_m=256, tile_n=1024, compute_dtype=None):
    """image_features: (B, S, H); weight_t: (H, P); bias: (P,). Returns (B, S, P)."""
    B, S, H = image_features.shape
    Hw, P = weight_t.shape
    assert H == Hw, "weight_t must be (hidden_size, projection_dim)"

    out_dtype = image_features.dtype
    M = B * S
    x2d = image_features.reshape(M, H)
    b2d = bias.reshape(1, P)

    # Optional reduced-precision matmul inputs (accumulation stays f32 in-kernel).
    if compute_dtype is not None:
        x2d = x2d.astype(compute_dtype)
        weight_t = weight_t.astype(compute_dtype)

    # Row tiling: prefer a divisor of M (no jnp.pad), pad only if M is ragged.
    tm, needs_pad = _choose_row_tile(M, tile_m)
    if needs_pad:
        # TODO(synk): ragged last-tile masking would avoid this extra HBM copy.
        M_pad = pl.cdiv(M, tm) * tm
        x2d = jnp.pad(x2d, ((0, M_pad - M), (0, 0)))
    else:
        M_pad = M

    # Projection tiling: tile P only when it splits into lane-dense blocks.
    if P > tile_n and P % tile_n == 0:
        tn = tile_n
    else:
        tn = P

    grid_m = M_pad // tm
    grid_n = P // tn
    single_buffer_w = grid_n == 1  # weight/bias block index constant -> 1 buffer

    def _resident_spec(shape, index_map):
        if single_buffer_w:
            return pl.BlockSpec(shape, index_map, pipeline_mode=pl.Buffered(1))
        return pl.BlockSpec(shape, index_map)

    # VMEM budget: double-buffered x/out tiles + (single|double)-buffered weight/bias.
    x_b = jnp.dtype(x2d.dtype).itemsize
    w_b = jnp.dtype(weight_t.dtype).itemsize
    o_b = jnp.dtype(out_dtype).itemsize
    w_bufs = 1 if single_buffer_w else 2
    vmem_est = (2 * tm * H * x_b
                + w_bufs * H * tn * w_b
                + w_bufs * tn * jnp.dtype(bias.dtype).itemsize
                + 2 * tm * tn * o_b)
    vmem_limit = int(min(max(2 * vmem_est + (4 << 20), 32 << 20), 64 << 20))

    cost = pl.CostEstimate(
        flops=2 * M_pad * H * P,
        transcendentals=0,
        bytes_accessed=(M_pad * H * x_b + H * P * w_b
                        + P * jnp.dtype(bias.dtype).itemsize + M_pad * P * o_b),
    )

    out2d = pl.pallas_call(
        _projector_kernel,
        out_shape=jax.ShapeDtypeStruct((M_pad, P), out_dtype),
        grid_spec=pltpu.PrefetchScalarGridSpec(
            num_scalar_prefetch=0,
            grid=(grid_m, grid_n),
            in_specs=[
                pl.BlockSpec((tm, H), lambda i, j: (i, 0)),        # activation rows
                _resident_spec((H, tn), lambda i, j: (0, j)),      # weight tile
                _resident_spec((1, tn), lambda i, j: (0, j)),      # bias tile
            ],
            out_specs=pl.BlockSpec((tm, tn), lambda i, j: (i, j)),
        ),
        compiler_params=pltpu.CompilerParams(
            dimension_semantics=("parallel", "parallel"),
            vmem_limit_bytes=vmem_limit,
        ),
        cost_estimate=cost,
    )(x2d, weight_t, b2d)

    if needs_pad:
        out2d = out2d[:M]
    return out2d.reshape(B, S, P)


def reference(image_features, weight_t, bias):
    return jnp.einsum("bsh,hp->bsp", image_features, weight_t) + bias


if __name__ == "__main__":
    # Small synthetic config (lane-dense last dims): batch=2, num_patches=16,
    # vision hidden_size=128, projection_dim=256.
    B, S, H, P = 2, 16, 128, 256

    key = jax.random.PRNGKey(0)
    k_x, k_w, k_b = jax.random.split(key, 3)

    image_features = jax.random.normal(k_x, (B, S, H), dtype=jnp.float32)
    # Deterministic "nn.Linear" params, stored transposed as (H, P).
    weight_t = (jax.random.normal(k_w, (H, P), dtype=jnp.float32)
                * (1.0 / jnp.sqrt(H)))
    bias = jax.random.normal(k_b, (P,), dtype=jnp.float32) * 0.5

    out = paligemma_multimodal_projector(image_features, weight_t, bias)
    out = jax.block_until_ready(out)

    ref = reference(image_features, weight_t, bias)
    assert out.shape == (B, S, P)
    assert jnp.allclose(out, ref, atol=2e-3, rtol=2e-3), "mismatch vs reference"

    print("KERNEL_OK")
</pallas_src>

<mosaic_0001>
module attributes {stable_mosaic.version = 11 : i64} {
  func.func @_projector_kernel(%arg0: i32, %arg1: i32, %arg2: memref<32x128xf32, #tpu.memory_space<vmem>>, %arg3: memref<128x256xf32, #tpu.memory_space<vmem>>, %arg4: memref<1x256xf32, #tpu.memory_space<vmem>>, %arg5: memref<32x256xf32, #tpu.memory_space<vmem>>) attributes {dimension_semantics = [#tpu.dimension_semantics<parallel>, #tpu.dimension_semantics<parallel>], iteration_bounds = array<i64: 1, 1>, scalar_prefetch = 0 : i64, scratch_operands = 0 : i64, tpu.core_type = #tpu.core_type<tc>, window_params = [{transform_indices = @transform_0, window_bounds = array<i64: 32, 128>}, {pipeline_mode = #tpu.pipeline_mode<synchronous>, transform_indices = @transform_1, window_bounds = array<i64: 128, 256>}, {pipeline_mode = #tpu.pipeline_mode<synchronous>, transform_indices = @transform_2, window_bounds = array<i64: 1, 256>}, {transform_indices = @transform_3, window_bounds = array<i64: 32, 256>}]} {
    %c0 = arith.constant 0 : index
    %c0_0 = arith.constant 0 : index
    %0 = vector.load %arg2[%c0, %c0_0] : memref<32x128xf32, #tpu.memory_space<vmem>>, vector<32x128xf32>
    %c0_1 = arith.constant 0 : index
    %c0_2 = arith.constant 0 : index
    %1 = vector.load %arg3[%c0_1, %c0_2] : memref<128x256xf32, #tpu.memory_space<vmem>>, vector<128x256xf32>
    %cst = arith.constant dense<0.000000e+00> : vector<32x256xf32>
    %2 = tpu.matmul %0, %1, %cst {dimension_numbers = #tpu.dot_dimension_numbers<[1], [0], [0], [1], [0, 0, 1, 1], [], []>} : vector<32x128xf32>, vector<128x256xf32>, vector<32x256xf32> -> vector<32x256xf32>
    %c0_3 = arith.constant 0 : index
    %c0_4 = arith.constant 0 : index
    %3 = vector.load %arg4[%c0_3, %c0_4] : memref<1x256xf32, #tpu.memory_space<vmem>>, vector<1x256xf32>
    %4 = vector.broadcast %3 : vector<1x256xf32> to vector<32x256xf32>
    %5 = arith.addf %2, %4 : vector<32x256xf32>
    %c0_5 = arith.constant 0 : index
    %c0_6 = arith.constant 0 : index
    %6 = vector.load %arg5[%c0_5, %c0_6] : memref<32x256xf32, #tpu.memory_space<vmem>>, vector<32x256xf32>
    tpu.vector_store %arg5[%c0_5, %c0_6], %5 {strides = array<i32>} : memref<32x256xf32, #tpu.memory_space<vmem>>, vector<32x256xf32>,
    return
  }
  func.func @transform_0(%arg0: i32, %arg1: i32) -> (i32, i32) {
    %c0_i32 = arith.constant 0 : i32
    %c0_i32_0 = arith.constant 0 : i32
    return %arg0, %c0_i32 : i32, i32
  }
  func.func @transform_1(%arg0: i32, %arg1: i32) -> (i32, i32) {
    %c0_i32 = arith.constant 0 : i32
    %c0_i32_0 = arith.constant 0 : i32
    return %c0_i32, %arg1 : i32, i32
  }
  func.func @transform_2(%arg0: i32, %arg1: i32) -> (i32, i32) {
    %c0_i32 = arith.constant 0 : i32
    %c0_i32_0 = arith.constant 0 : i32
    return %c0_i32, %arg1 : i32, i32
  }
  func.func @transform_3(%arg0: i32, %arg1: i32) -> (i32, i32) {
    %c0_i32 = arith.constant 0 : i32
    return %arg0, %arg1 : i32, i32
  }
}

</mosaic_0001>

<llo_original>
// kernel: paligemma_multimodal_projector.1
$region0: #{paligemma_multimodal_projector.1}
  #allocation0 [shape = 'u32[]', space=smem, size = 0x4, offset = 0x4, fixed_abs, tag = 'smem constant byte address 0x4 - core index']
  #allocation1 [shape = 'u32[144,128]{1,0:T(1,128)}', space=vmem, size = 0x12000, scoped, tag = 'internal scratch']
  %s0 = inlined_call_operand.hbm [shape: f32[32,128], index: 0, kind: input, shape index: {}]
  %s1 = inlined_call_operand.hbm [shape: f32[128,256], index: 1, kind: input, shape index: {}]
  %s2 = inlined_call_operand.vmem [shape: f32[1,256], index: 2, kind: input, shape index: {}]
  %s3 = inlined_call_operand.hbm [shape: f32[32,256], index: 3, kind: output, shape index: {}]
  %s4 = sld [smem:[#allocation0]]
  $region30: #{paligemma_multimodal_projector.1} parent=0
    _
  %s6 = ssub.s32 1, %s4
  %s7 = scalar_select 0, %s6, %s4
  $region1: #{paligemma_multimodal_projector.1} parent=0
    #allocation2 [shape = 'u8[16384]{0}', space=vmem, size = 0x4000, scoped, tag = 'input window, operand 0, single buffered']
    #allocation3 [shape = 's32[1]{0}', space=sflag, size = 0x4, scoped, tag = 'scoped memory for paligemma_multimodal_projector.1']
    #allocation4 [shape = 's32[1]{0}', space=sflag, size = 0x4, scoped, tag = 'scoped memory for paligemma_multimodal_projector.1']
    #allocation5 [shape = 'u8[131072]{0}', space=vmem, size = 0x20000, scoped, tag = 'input window, operand 1, single buffered']
    #allocation6 [shape = 's32[1]{0}', space=sflag, size = 0x4, scoped, tag = 'scoped memory for paligemma_multimodal_projector.1']
    #allocation7 [shape = 'u8[32768]{0}', space=vmem, size = 0x8000, scoped, tag = 'output window, operand 0, single buffered']
    %8 = vsyncpa [#allocation3], 0
    %9 = vsyncpa [#allocation6], 0
    %10 = vsyncpa [#allocation4], 0
    // Predicated region
    $region2: #{paligemma_multimodal_projector.1} parent=1 // pred_check
      _
    $region3: #{paligemma_multimodal_projector.1} parent=1 // pred_check_branch
      %12 = sbr.rel (0) target = $region5
    $region4: #{paligemma_multimodal_projector.1} parent=1 // pred_region
      %s14 = ssub.s32 512, 512
      %15 = vsyncadd [#allocation3], %s14
      %s16 = sshll.u32 [#allocation2], 4
      %s17 = int_to_ptr.vmem [resolvable:$true] %s16
      %22 = dma.hbm_to_vmem [thread:$0]  %s0, 512, %s17, [#allocation3], 128, 128, 8
    $region5: #{paligemma_multimodal_projector.1} parent=1 // pred_fallthru
      _
    // Predicated region
    $region6: #{paligemma_multimodal_projector.1} parent=1 // pred_check
      _
    $region7: #{paligemma_multimodal_projector.1} parent=1 // pred_check_branch
      %24 = sbr.rel (0) target = $region9
    $region8: #{paligemma_multimodal_projector.1} parent=1 // pred_region
      %s26 = ssub.s32 4096, 4096
      %27 = vsyncadd [#allocation6], %s26
      %s28 = sshll.u32 [#allocation5], 4
      %s29 = int_to_ptr.vmem [resolvable:$true] %s28
      %34 = dma.hbm_to_vmem [thread:$0]  %s1, 4096, %s29, [#allocation6], 256, 256, 16
    $region9: #{paligemma_multimodal_projector.1} parent=1 // pred_fallthru
      _
    // Predicated region
    $region10: #{paligemma_multimodal_projector.1} parent=1 // pred_check
      _
    $region11: #{paligemma_multimodal_projector.1} parent=1 // pred_check_branch
      %36 = sbr.rel (0) target = $region13
    $region12: #{paligemma_multimodal_projector.1} parent=1 // pred_region
      _
    $region13: #{paligemma_multimodal_projector.1} parent=1 // pred_fallthru
      _
    // Predicated region
    $region14: #{paligemma_multimodal_projector.1} parent=1 // pred_check
      _
    $region15: #{paligemma_multimodal_projector.1} parent=1 // pred_check_branch
      %38 = sbr.rel (0) target = $region17
    $region16: #{paligemma_multimodal_projector.1} parent=1 // pred_region
      %39 = dma.done [#allocation3], 512
    $region17: #{paligemma_multimodal_projector.1} parent=1 // pred_fallthru
      _
    // Predicated region
    $region18: #{paligemma_multimodal_projector.1} parent=1 // pred_check
      _
    $region19: #{paligemma_multimodal_projector.1} parent=1 // pred_check_branch
      %41 = sbr.rel (0) target = $region21
    $region20: #{paligemma_multimodal_projector.1} parent=1 // pred_region
      %42 = dma.done [#allocation6], 4096
    $region21: #{paligemma_multimodal_projector.1} parent=1 // pred_fallthru
      _
    %v43 = vld [vmem:[#allocation2] sm:$0xff]
    %v44 = vld [vmem:[#allocation2 + $0x8] sm:$0xff]
    %v45 = vld [vmem:[#allocation2 + $0x10] sm:$0xff]
    %v46 = vld [vmem:[#allocation2 + $0x18] sm:$0xff]
    %v47 = vld [vmem:[#allocation5] sm:$0xff]
    %v48 = vld [vmem:[#allocation5 + $0x8] sm:$0xff]
    %v49 = vld [vmem:[#allocation5 + $0x10] sm:$0xff]
    %v50 = vld [vmem:[#allocation5 + $0x18] sm:$0xff]
    %v51 = vld [vmem:[#allocation5 + $0x20] sm:$0xff]
    %v52 = vld [vmem:[#allocation5 + $0x28] sm:$0xff]
    %v53 = vld [vmem:[#allocation5 + $0x30] sm:$0xff]
    %v54 = vld [vmem:[#allocation5 + $0x38] sm:$0xff]
    %v55 = vld [vmem:[#allocation5 + $0x40] sm:$0xff]
    %v56 = vld [vmem:[#allocation5 + $0x48] sm:$0xff]
    %v57 = vld [vmem:[#allocation5 + $0x50] sm:$0xff]
    %v58 = vld [vmem:[#allocation5 + $0x58] sm:$0xff]
    %v59 = vld [vmem:[#allocation5 + $0x60] sm:$0xff]
    %v60 = vld [vmem:[#allocation5 + $0x68] sm:$0xff]
    %v61 = vld [vmem:[#allocation5 + $0x70] sm:$0xff]
    %v62 = vld [vmem:[#allocation5 + $0x78] sm:$0xff]
    %v63 = vld [vmem:[#allocation5 + $0x80] sm:$0xff]
    %v64 = vld [vmem:[#allocation5 + $0x88] sm:$0xff]
    %v65 = vld [vmem:[#allocation5 + $0x90] sm:$0xff]
    %v66 = vld [vmem:[#allocation5 + $0x98] sm:$0xff]
    %v67 = vld [vmem:[#allocation5 + $0xa0] sm:$0xff]
    %v68 = vld [vmem:[#allocation5 + $0xa8] sm:$0xff]
    %v69 = vld [vmem:[#allocation5 + $0xb0] sm:$0xff]
    %v70 = vld [vmem:[#allocation5 + $0xb8] sm:$0xff]
    %v71 = vld [vmem:[#allocation5 + $0xc0] sm:$0xff]
    %v72 = vld [vmem:[#allocation5 + $0xc8] sm:$0xff]
    %v73 = vld [vmem:[#allocation5 + $0xd0] sm:$0xff]
    %v74 = vld [vmem:[#allocation5 + $0xd8] sm:$0xff]
    %v75 = vld [vmem:[#allocation5 + $0xe0] sm:$0xff]
    %v76 = vld [vmem:[#allocation5 + $0xe8] sm:$0xff]
    %v77 = vld [vmem:[#allocation5 + $0xf0] sm:$0xff]
    %v78 = vld [vmem:[#allocation5 + $0xf8] sm:$0xff]
    %v79 = vld [vmem:[%s2] sm:$0x3]
    %v81 = vlaneseq
    %v82 = vshrl.u32 %v81, 7
    %v83 = vsub.s32 0, %v82
    %v84 = vrot.slane %v79, %v83
    %v85 = vlaneseq
    %v86 = vshrl.u32 %v85, 7
    %v87 = vsub.s32 1, %v86
    %v88 = vrot.slane %v79, %v87
    %91 = vmatprep.subr.mxu0 %v48
    %92 = vmatpush1.msra.mxu0 %v47
    %93 = vmatprep.subr.mxu0 %v50
    %94 = vmatpush1.msra.mxu0 %v49
    %95 = vmatprep.subr.mxu0 %v52
    %96 = vmatpush1.msra.mxu0 %v51
    %97 = vmatprep.subr.mxu0 %v54
    %98 = vmatpush1.msra.mxu0 %v53
    %99 = vmatprep.subr.mxu0 %v56
    %100 = vmatpush1.msra.mxu0 %v55
    %101 = vmatprep.subr.mxu0 %v58
    %102 = vmatpush1.msra.mxu0 %v57
    %103 = vmatprep.subr.mxu0 %v60
    %104 = vmatpush1.msra.mxu0 %v59
    %105 = vmatprep.subr.mxu0 %v62
    %106 = vmatpush1.msra.mxu0 %v61
    %107 = vmatprep.subr.mxu0 %v64
    %108 = vmatpush1.msra.mxu0 %v63
    %109 = vmatprep.subr.mxu0 %v66
    %110 = vmatpush1.msra.mxu0 %v65
    %111 = vmatprep.subr.mxu0 %v68
    %112 = vmatpush1.msra.mxu0 %v67
    %113 = vmatprep.subr.mxu0 %v70
    %114 = vmatpush1.msra.mxu0 %v69
    %115 = vmatprep.subr.mxu0 %v72
    %116 = vmatpush1.msra.mxu0 %v71
    %117 = vmatprep.subr.mxu0 %v74
    %118 = vmatpush1.msra.mxu0 %v73
    %119 = vmatprep.subr.mxu0 %v76
    %120 = vmatpush1.msra.mxu0 %v75
    %121 = vmatprep.subr.mxu0 %v78
    %122 = vmatpush1.msra.mxu0 %v77
    %123 = vmatprep.subr.mxu0 0.0
    %124 = vmatpush1.msra.mxu0 0.0
    %125 = vmatprep.subr.mxu0 0.0
    %126 = vmatpush1.msra.mxu0 0.0
    %127 = vmatprep.subr.mxu0 0.0
    %128 = vmatpush1.msra.mxu0 0.0
    %129 = vmatprep.subr.mxu0 0.0
    %130 = vmatpush1.msra.mxu0 0.0
    %131 = vmatprep.subr.mxu0 0.0
    %132 = vmatpush1.msra.mxu0 0.0
    %133 = vmatprep.subr.mxu0 0.0
    %134 = vmatpush1.msra.mxu0 0.0
    %135 = vmatprep.subr.mxu0 0.0
    %136 = vmatpush1.msra.mxu0 0.0
    %137 = vmatprep.subr.mxu0 0.0
    %138 = vmatpush1.msra.mxu0 0.0
    %139 = vmatprep.subr.mxu0 0.0
    %140 = vmatpush1.msra.mxu0 0.0
    %141 = vmatprep.subr.mxu0 0.0
    %142 = vmatpush1.msra.mxu0 0.0
    %143 = vmatprep.subr.mxu0 0.0
    %144 = vmatpush1.msra.mxu0 0.0
    %145 = vmatprep.subr.mxu0 0.0
    %146 = vmatpush1.msra.mxu0 0.0
    %147 = vmatprep.subr.mxu0 0.0
    %148 = vmatpush1.msra.mxu0 0.0
    %149 = vmatprep.subr.mxu0 0.0
    %150 = vmatpush1.msra.mxu0 0.0
    %151 = vmatprep.subr.mxu0 0.0
    %152 = vmatpush1.msra.mxu0 0.0
    %153 = vmatprep.subr.mxu0 0.0
    %154 = vmatpush1.msra.mxu0 0.0
    %155 = vmatprep.mubr.f32.mxu0 0.0
    %156 = vmatmul.mubr.f32.gmra.mrb[0].mxu0 %v43
    %v157 = vpop.f32.mrb[0].mxu0
    %v158 = vadd.f32 %v84, %v157
    %v159 = vpop.f32.mrb[0].mxu0
    %v160 = vadd.f32 %v88, %v159
    %161 = vmatprep.mubr.f32.mxu0 0.0
    %162 = vmatmul.mubr.f32.gmra.mrb[0].mxu0 %v44
    %v163 = vpop.f32.mrb[0].mxu0
    %v164 = vadd.f32 %v84, %v163
    %v165 = vpop.f32.mrb[0].mxu0
    %v166 = vadd.f32 %v88, %v165
    %167 = vmatprep.mubr.f32.mxu0 0.0
    %168 = vmatmul.mubr.f32.gmra.mrb[0].mxu0 %v45
    %v169 = vpop.f32.mrb[0].mxu0
    %v170 = vadd.f32 %v84, %v169
    %v171 = vpop.f32.mrb[0].mxu0
    %v172 = vadd.f32 %v88, %v171
    %173 = vmatprep.mubr.f32.mxu0 0.0
    %174 = vmatmul.mubr.f32.gmra.mrb[0].mxu0 %v46
    %v175 = vpop.f32.mrb[0].mxu0
    %v176 = vadd.f32 %v84, %v175
    %v177 = vpop.f32.mrb[0].mxu0
    %v178 = vadd.f32 %v88, %v177
    %179 = vdwg.mxu0
    %180 = vst [vmem:[#allocation7] sm:$0xff] %v158
    %181 = vst [vmem:[#allocation7 + $0x8] sm:$0xff] %v160
    %182 = vst [vmem:[#allocation7 + $0x10] sm:$0xff] %v164
    %183 = vst [vmem:[#allocation7 + $0x18] sm:$0xff] %v166
    %184 = vst [vmem:[#allocation7 + $0x20] sm:$0xff] %v170
    %185 = vst [vmem:[#allocation7 + $0x28] sm:$0xff] %v172
    %186 = vst [vmem:[#allocation7 + $0x30] sm:$0xff] %v176
    %187 = vst [vmem:[#allocation7 + $0x38] sm:$0xff] %v178
    // Predicated region
    $region22: #{paligemma_multimodal_projector.1} parent=1 // pred_check
      _
    $region23: #{paligemma_multimodal_projector.1} parent=1 // pred_check_branch
      %189 = sbr.rel (0) target = $region25
    $region24: #{paligemma_multimodal_projector.1} parent=1 // pred_region
      %s191 = ssub.s32 1024, 1024
      %192 = vsyncadd [#allocation4], %s191
      %s193 = sshll.u32 [#allocation7], 4
      %s194 = int_to_ptr.vmem [resolvable:$true] %s193
      %199 = dma.vmem_to_hbm [thread:$0]  %s194, 1024, %s3, [#allocation4], 256, 256, 16
    $region25: #{paligemma_multimodal_projector.1} parent=1 // pred_fallthru
      _
    // Predicated region
    $region26: #{paligemma_multimodal_projector.1} parent=1 // pred_check
      _
    $region27: #{paligemma_multimodal_projector.1} parent=1 // pred_check_branch
      %201 = sbr.rel (0) target = $region29
    $region28: #{paligemma_multimodal_projector.1} parent=1 // pred_region
      %202 = dma.done [#allocation4], 1024
    $region29: #{paligemma_multimodal_projector.1} parent=1 // pred_fallthru
      _
    %203 = vsyncpa [#allocation3], 1
    %204 = vsyncpa [#allocation6], 1
    %205 = vsyncpa [#allocation4], 1

</llo_original>
